<compile_context>
chip_gen: v7x
topology: tpu7x:2x2x1
jax: 0.10.0
libtpu: 0.0.40
codegen_flags: <defaults>
</compile_context>

<pallas_src>
import functools

import jax
import jax.numpy as jnp
from jax import lax
from jax.experimental import pallas as pl
from jax.experimental.pallas import tpu as pltpu

_BN_EPS = 1e-5
_VMEM_LIMIT = 32 * 1024 * 1024
_VMEM_WHOLE = pl.BlockSpec(memory_space=pltpu.MemorySpace.VMEM)


def _round_up(x, m):
    return (x + m - 1) // m * m


# ----------------------------------------------------------------------------
# Kernel 1: tiled bf16 GEMM with fused affine epilogue + fused partial BN stats
# ----------------------------------------------------------------------------
def _gemm_kernel(a_ref, b_ref, scale_ref, shift_ref, o_ref, stats_ref, acc_ref):
    k = pl.program_id(2)

    @pl.when(k == 0)
    def _():
        acc_ref[...] = jnp.zeros_like(acc_ref)

    acc_ref[...] += jnp.dot(a_ref[...], b_ref[...],
                            preferred_element_type=jnp.float32)

    @pl.when(k == pl.num_programs(2) - 1)
    def _():
        acc = acc_ref[...]
        # per-channel partial [sum, sum_sq] of the raw f32 accumulator
        su = jnp.sum(acc, axis=0, keepdims=True)
        ss = jnp.sum(acc * acc, axis=0, keepdims=True)
        stats_ref[...] = jnp.concatenate([su, ss], axis=0)[None]
        y = acc * scale_ref[...] + shift_ref[...]
        o_ref[...] = y.astype(o_ref.dtype)


def fused_matmul(a, b, scale=None, shift=None, out_dtype=jnp.float32):
    """C = (A @ B) * scale + shift, tiled bf16 MXU GEMM.

    Returns (C[:M,:N], stats) where stats has shape (m_tiles, 2, N_pad) and
    holds per-row-tile partial [sum, sum_sq] of the raw accumulator columns
    (zero-padded rows/cols contribute nothing).
    """
    M, K = a.shape
    K2, N = b.shape
    assert K == K2
    if scale is None:
        scale = jnp.ones((N,), jnp.float32)
    if shift is None:
        shift = jnp.zeros((N,), jnp.float32)

    # Tile selection: multiples of the vreg/MXU geometry, capped at 256x256x512
    # so the working set stays well inside v7x's smaller VMEM as well.
    tm = 256 if M >= 256 else _round_up(M, 8)
    mp = _round_up(M, tm)
    np_ = _round_up(N, 128)
    if np_ <= 256:
        tn = np_
    else:
        tn = 256 if np_ % 256 == 0 else 128
    kp = _round_up(K, 128)
    if kp <= 768:
        tk = kp
    else:
        tk = next(t for t in (512, 384, 256, 128) if kp % t == 0)

    def _pad2(x, r, c, dt):
        x = x.astype(dt)
        if r or c:
            x = jnp.pad(x, ((0, r), (0, c)))
        return x

    a_p = _pad2(a, mp - M, kp - K, jnp.bfloat16)
    b_p = _pad2(b, kp - K, np_ - N, jnp.bfloat16)
    scale_p = _pad2(scale.reshape(1, N), 0, np_ - N, jnp.float32)
    shift_p = _pad2(shift.reshape(1, N), 0, np_ - N, jnp.float32)

    grid = (mp // tm, np_ // tn, kp // tk)
    m_tiles = grid[0]
    out_bytes = mp * np_ * jnp.dtype(out_dtype).itemsize
    cost = pl.CostEstimate(
        flops=2 * mp * np_ * kp,
        transcendentals=0,
        bytes_accessed=int(a_p.size * 2 + b_p.size * 2 + out_bytes),
    )

    out, stats = pl.pallas_call(
        _gemm_kernel,
        out_shape=(
            jax.ShapeDtypeStruct((mp, np_), out_dtype),
            jax.ShapeDtypeStruct((m_tiles, 2, np_), jnp.float32),
        ),
        grid_spec=pltpu.PrefetchScalarGridSpec(
            num_scalar_prefetch=0,
            grid=grid,
            in_specs=[
                pl.BlockSpec((tm, tk), lambda i, j, k: (i, k)),
                pl.BlockSpec((tk, tn), lambda i, j, k: (k, j)),
                pl.BlockSpec((1, tn), lambda i, j, k: (0, j)),
                pl.BlockSpec((1, tn), lambda i, j, k: (0, j)),
            ],
            out_specs=[
                pl.BlockSpec((tm, tn), lambda i, j, k: (i, j)),
                pl.BlockSpec((1, 2, tn), lambda i, j, k: (i, 0, j)),
            ],
            scratch_shapes=[pltpu.VMEM((tm, tn), jnp.float32)],
        ),
        compiler_params=pltpu.CompilerParams(
            dimension_semantics=("parallel", "parallel", "arbitrary"),
            vmem_limit_bytes=_VMEM_LIMIT,
        ),
        cost_estimate=cost,
    )(a_p, b_p, scale_p, shift_p)

    return out[:M, :N], stats


# ----------------------------------------------------------------------------
# Kernel 2: fused BN-apply / bias / residual / ReLU (row-tiled elementwise)
# ----------------------------------------------------------------------------
def _affine_kernel(y_ref, scale_ref, shift_ref, o_ref, *, relu):
    y = y_ref[...].astype(jnp.float32) * scale_ref[...] + shift_ref[...]
    if relu:
        y = jnp.maximum(y, 0.0)
    o_ref[...] = y.astype(o_ref.dtype)


def _affine_res_kernel(y_ref, scale_ref, shift_ref, r_ref, o_ref, *, relu):
    y = y_ref[...].astype(jnp.float32) * scale_ref[...] + shift_ref[...]
    y = y + r_ref[...].astype(jnp.float32)
    if relu:
        y = jnp.maximum(y, 0.0)
    o_ref[...] = y.astype(o_ref.dtype)


def _affine_res_affine_kernel(y_ref, scale_ref, shift_ref,
                              r_ref, rscale_ref, rshift_ref, o_ref, *, relu):
    y = y_ref[...].astype(jnp.float32) * scale_ref[...] + shift_ref[...]
    r = r_ref[...].astype(jnp.float32) * rscale_ref[...] + rshift_ref[...]
    y = y + r
    if relu:
        y = jnp.maximum(y, 0.0)
    o_ref[...] = y.astype(o_ref.dtype)


def affine_act(y, scale, shift, *, relu, res=None, res_scale=None,
               res_shift=None, out_dtype=jnp.bfloat16):
    """out = [relu]( y*scale + shift  (+ res  |  + res*res_scale + res_shift) )."""
    M, C = y.shape
    tr = M if M <= 2048 else 1024
    mp = _round_up(M, tr)
    pad = mp - M

    def _rows(t):
        return jnp.pad(t, ((0, pad), (0, 0))) if pad else t

    row_spec = pl.BlockSpec((tr, C), lambda i: (i, 0))
    vec_spec = pl.BlockSpec((1, C), lambda i: (0, 0))
    args = [_rows(y), scale.reshape(1, C).astype(jnp.float32),
            shift.reshape(1, C).astype(jnp.float32)]
    in_specs = [row_spec, vec_spec, vec_spec]

    if res is None:
        kern = functools.partial(_affine_kernel, relu=relu)
    elif res_scale is None:
        kern = functools.partial(_affine_res_kernel, relu=relu)
        args.append(_rows(res))
        in_specs.append(row_spec)
    else:
        kern = functools.partial(_affine_res_affine_kernel, relu=relu)
        args += [_rows(res), res_scale.reshape(1, C).astype(jnp.float32),
                 res_shift.reshape(1, C).astype(jnp.float32)]
        in_specs += [row_spec, vec_spec, vec_spec]

    out = pl.pallas_call(
        kern,
        out_shape=jax.ShapeDtypeStruct((mp, C), out_dtype),
        grid_spec=pltpu.PrefetchScalarGridSpec(
            num_scalar_prefetch=0, grid=(mp // tr,),
            in_specs=in_specs, out_specs=row_spec),
        compiler_params=pltpu.CompilerParams(
            dimension_semantics=("parallel",),
            vmem_limit_bytes=_VMEM_LIMIT),
    )(*args)
    return out[:M] if pad else out


# ----------------------------------------------------------------------------
# Kernel 3: 3x3/s2/p1 max-pool from 4 even/odd decimations (no 9x duplication)
# ----------------------------------------------------------------------------
def _maxpool_3x3_kernel(q00_ref, q01_ref, q10_ref, q11_ref, o_ref):
    _, ho, wo, _ = o_ref.shape

    def win(q_ref, dr, dc):
        return q_ref[:, dr:dr + ho, dc:dc + wo, :]

    m = win(q00_ref, 0, 0)
    for t in (win(q01_ref, 0, 0), win(q00_ref, 0, 1),
              win(q10_ref, 0, 0), win(q11_ref, 0, 0), win(q10_ref, 0, 1),
              win(q00_ref, 1, 0), win(q01_ref, 1, 0), win(q00_ref, 1, 1)):
        m = jnp.maximum(m, t)
    o_ref[...] = m.astype(o_ref.dtype)


def maxpool_3x3_s2_p1(x, out_dtype=jnp.bfloat16):
    n, h, w, c = x.shape
    ho = (h - 1) // 2 + 1
    wo = (w - 1) // 2 + 1
    hp, wp = 2 * (ho + 1), 2 * (wo + 1)
    xp = jnp.pad(x, ((0, 0), (1, hp - h - 1), (1, wp - w - 1), (0, 0)),
                 constant_values=-jnp.inf)
    # Even/odd decimation: four arrays whose total size equals xp (no k*k blowup).
    qs = [xp[:, a::2, b::2, :] for a in (0, 1) for b in (0, 1)]
    return pl.pallas_call(
        _maxpool_3x3_kernel,
        out_shape=jax.ShapeDtypeStruct((n, ho, wo, c), out_dtype),
        in_specs=[_VMEM_WHOLE] * 4,
        out_specs=_VMEM_WHOLE,
        compiler_params=pltpu.CompilerParams(vmem_limit_bytes=_VMEM_LIMIT),
    )(*qs)


# ----------------------------------------------------------------------------
# Kernel 4: global average pool (vectorized reduction)
# ----------------------------------------------------------------------------
def _gap_kernel(x_ref, o_ref):
    o_ref[...] = jnp.mean(x_ref[...].astype(jnp.float32), axis=1)


def global_avgpool(x):
    n, h, w, c = x.shape
    return pl.pallas_call(
        _gap_kernel,
        out_shape=jax.ShapeDtypeStruct((n, c), jnp.float32),
        in_specs=[_VMEM_WHOLE],
        out_specs=_VMEM_WHOLE,
        compiler_params=pltpu.CompilerParams(vmem_limit_bytes=_VMEM_LIMIT),
    )(x.reshape(n, h * w, c))


# ----------------------------------------------------------------------------
# Conv / BN glue (patch extraction + tiny per-channel math in plain JAX)
# ----------------------------------------------------------------------------
# TODO(synk): patch extraction is still built by XLA (bf16, so half the old
# traffic); folding kh*kw into the GEMM reduction grid (implicit GEMM with
# element-offset BlockSpecs on the padded NHWC input) is left as a follow-up.
def _extract_patches(x, kh, kw, stride, pad):
    n, h, w, c = x.shape
    xp = jnp.pad(x, ((0, 0), (pad, pad), (pad, pad), (0, 0))) if pad else x
    ho = (h + 2 * pad - kh) // stride + 1
    wo = (w + 2 * pad - kw) // stride + 1
    cols = [xp[:, i:i + stride * ho:stride, j:j + stride * wo:stride, :]
            for i in range(kh) for j in range(kw)]
    patches = jnp.concatenate(cols, axis=-1)  # (n, ho, wo, kh*kw*c), (kh,kw,cin)
    return patches.reshape(n * ho * wo, kh * kw * c), n, ho, wo


def conv2d_raw(x, w_hwio, *, stride, pad):
    kh, kw, cin, cout = w_hwio.shape
    if kh == 1 and kw == 1:
        xs = x[:, ::stride, ::stride, :] if stride > 1 else x
        n, ho, wo, _ = xs.shape
        a = xs.reshape(n * ho * wo, cin)
    else:
        a, n, ho, wo = _extract_patches(x, kh, kw, stride, pad)
    y, stats = fused_matmul(a, w_hwio.reshape(kh * kw * cin, cout))
    return y.reshape(n, ho, wo, cout), stats, n * ho * wo


def _bn_scale_shift(stats, c, m_true, gamma, beta, extra_shift=None):
    # Training-mode (biased) batch statistics from the GEMM's fused partial sums.
    su = jnp.sum(stats[:, 0, :c], axis=0)
    ss = jnp.sum(stats[:, 1, :c], axis=0)
    mean = su / m_true
    var = jnp.maximum(ss / m_true - mean * mean, 0.0)
    if extra_shift is not None:       # epilogue shift (e.g. fc bias) applied post-stats
        mean = mean + extra_shift
    inv = gamma * lax.rsqrt(var + _BN_EPS)
    return inv, beta - mean * inv


def conv_bn(x, w, gamma, beta, *, stride, pad):
    y, stats, m = conv2d_raw(x, w, stride=stride, pad=pad)
    scale, shift = _bn_scale_shift(stats, w.shape[3], m, gamma, beta)
    return y, scale, shift


# ----------------------------------------------------------------------------
# ResNet18 structure
# ----------------------------------------------------------------------------
def basic_block(x, blk):
    stride = 2 if "down_w" in blk else 1
    c_out = blk["conv1_w"].shape[3]

    y1, s1, t1 = conv_bn(x, blk["conv1_w"], *blk["bn1"], stride=stride, pad=1)
    n, h1, w1, _ = y1.shape
    a1 = affine_act(y1.reshape(-1, c_out), s1, t1, relu=True)
    a1 = a1.reshape(n, h1, w1, c_out)

    y2, s2, t2 = conv_bn(a1, blk["conv2_w"], *blk["bn2"], stride=1, pad=1)
    n, h2, w2, _ = y2.shape

    if "down_w" in blk:
        yd, sd, td = conv_bn(x, blk["down_w"], *blk["down_bn"],
                             stride=stride, pad=0)
        out = affine_act(y2.reshape(-1, c_out), s2, t2, relu=True,
                         res=yd.reshape(-1, c_out), res_scale=sd, res_shift=td)
    else:
        out = affine_act(y2.reshape(-1, c_out), s2, t2, relu=True,
                         res=x.reshape(-1, c_out))
    return out.reshape(n, h2, w2, c_out)


def make_params(key, *, in_ch, mlp_hidden_size, projection_size):
    keys = iter(jax.random.split(key, 64))

    def w(shape, scale=0.05):
        return jax.random.normal(next(keys), shape, jnp.float32) * scale

    def bn(c):
        return (jnp.ones((c,), jnp.float32), jnp.zeros((c,), jnp.float32))

    params = {
        "conv1_w": w((7, 7, in_ch, 64)),  # replaced first conv (random init, no bias)
        "bn1": bn(64),
    }
    stage_cfg = [(64, 64, 1), (64, 128, 2), (128, 256, 2), (256, 512, 2)]
    layers = []
    for cin, cout, stride in stage_cfg:
        blocks = []
        for b in range(2):
            s = stride if b == 0 else 1
            ci = cin if b == 0 else cout
            blk = {
                "conv1_w": w((3, 3, ci, cout)),
                "bn1": bn(cout),
                "conv2_w": w((3, 3, cout, cout)),
                "bn2": bn(cout),
            }
            if s != 1 or ci != cout:
                blk["down_w"] = w((1, 1, ci, cout))
                blk["down_bn"] = bn(cout)
            blocks.append(blk)
        layers.append(blocks)
    params["layers"] = layers
    # MLPHead: Linear -> BatchNorm1d -> ReLU -> Linear
    params["fc1_w"] = w((512, mlp_hidden_size))
    params["fc1_b"] = jnp.zeros((mlp_hidden_size,), jnp.float32)
    params["bn_fc"] = bn(mlp_hidden_size)
    params["fc2_w"] = w((mlp_hidden_size, projection_size))
    params["fc2_b"] = jnp.zeros((projection_size,), jnp.float32)
    return params


def resnet_forward(params, x_nchw, repr=False):
    x = jnp.transpose(x_nchw, (0, 2, 3, 1)).astype(jnp.bfloat16)  # NCHW -> NHWC

    # stem: conv7x7/2 -> BN -> ReLU -> maxpool3x3/2
    y, s, t = conv_bn(x, params["conv1_w"], *params["bn1"], stride=2, pad=3)
    n, h, w, c = y.shape
    a = affine_act(y.reshape(-1, c), s, t, relu=True, out_dtype=jnp.float32)
    x = maxpool_3x3_s2_p1(a.reshape(n, h, w, c))

    for blocks in params["layers"]:
        for blk in blocks:
            x = basic_block(x, blk)

    h_repr = global_avgpool(x)  # == adaptive avg-pool to 1x1 + flatten -> (N, 512)
    if repr:
        return h_repr

    # MLPHead: Linear -> BatchNorm1d -> ReLU -> Linear (fc biases fused in epilogue)
    z1, stats1 = fused_matmul(h_repr, params["fc1_w"], shift=params["fc1_b"])
    s1, t1 = _bn_scale_shift(stats1, params["fc1_w"].shape[1], h_repr.shape[0],
                             *params["bn_fc"], extra_shift=params["fc1_b"])
    a1 = affine_act(z1, s1, t1, relu=True)
    z2, _ = fused_matmul(a1, params["fc2_w"], shift=params["fc2_b"])
    return z2


# TODO(synk): torchvision pretrained-weight loading and BatchNorm running-stat
# momentum updates (training side effects) are not reproducible in-kernel.

if __name__ == "__main__":
    key = jax.random.PRNGKey(0)
    kparam, kx = jax.random.split(key)
    params = make_params(kparam, in_ch=4, mlp_hidden_size=128, projection_size=64)
    x = jax.random.normal(kx, (2, 4, 16, 16), jnp.float32)  # NCHW, like PyTorch

    z = resnet_forward(params, x)               # projection output
    h = resnet_forward(params, x, repr=True)    # representation output
    jax.block_until_ready(z)
    jax.block_until_ready(h)
    assert z.shape == (2, 64) and z.dtype == jnp.float32
    assert h.shape == (2, 512) and h.dtype == jnp.float32
    assert bool(jnp.all(jnp.isfinite(z))) and bool(jnp.all(jnp.isfinite(h)))
    print("KERNEL_OK")
</pallas_src>

<mosaic_0001>
module attributes {stable_mosaic.version = 11 : i64} {
  func.func @_gemm_kernel(%arg0: i32, %arg1: i32, %arg2: i32, %arg3: memref<128x256xbf16, #tpu.memory_space<vmem>>, %arg4: memref<256x128xbf16, #tpu.memory_space<vmem>>, %arg5: memref<1x128xf32, #tpu.memory_space<vmem>>, %arg6: memref<1x128xf32, #tpu.memory_space<vmem>>, %arg7: memref<128x128xf32, #tpu.memory_space<vmem>>, %arg8: memref<1x2x128xf32, #tpu.memory_space<vmem>>, %arg9: memref<128x128xf32, #tpu.memory_space<vmem>>) attributes {dimension_semantics = [#tpu.dimension_semantics<parallel>, #tpu.dimension_semantics<parallel>, #tpu.dimension_semantics<arbitrary>], iteration_bounds = array<i64: 1, 1, 1>, scalar_prefetch = 0 : i64, scratch_operands = 1 : i64, tpu.core_type = #tpu.core_type<tc>, window_params = [{transform_indices = @transform_0, window_bounds = array<i64: 128, 256>}, {transform_indices = @transform_1, window_bounds = array<i64: 256, 128>}, {transform_indices = @transform_2, window_bounds = array<i64: 1, 128>}, {transform_indices = @transform_3, window_bounds = array<i64: 1, 128>}, {transform_indices = @transform_4, window_bounds = array<i64: 128, 128>}, {transform_indices = @transform_5, window_bounds = array<i64: 1, 2, 128>}]} {
    %c0_i32 = arith.constant 0 : i32
    %0 = arith.cmpi eq, %arg2, %c0_i32 : i32
    %1 = arith.extui %0 : i1 to i32
    %c0_i32_0 = arith.constant 0 : i32
    %2 = arith.cmpi ne, %1, %c0_i32_0 : i32
    scf.if %2 {
      %cst_10 = arith.constant 0.000000e+00 : f32
      %12 = vector.broadcast %cst_10 : f32 to vector<128x128xf32>
      %c0_11 = arith.constant 0 : index
      %c0_12 = arith.constant 0 : index
      %13 = vector.load %arg9[%c0_11, %c0_12] : memref<128x128xf32, #tpu.memory_space<vmem>>, vector<128x128xf32>
      tpu.vector_store %arg9[%c0_11, %c0_12], %12 {strides = array<i32>} : memref<128x128xf32, #tpu.memory_space<vmem>>, vector<128x128xf32>,
    } else {
    }
    %c0 = arith.constant 0 : index
    %c0_1 = arith.constant 0 : index
    %3 = vector.load %arg9[%c0, %c0_1] : memref<128x128xf32, #tpu.memory_space<vmem>>, vector<128x128xf32>
    %c0_2 = arith.constant 0 : index
    %c0_3 = arith.constant 0 : index
    %4 = vector.load %arg3[%c0_2, %c0_3] : memref<128x256xbf16, #tpu.memory_space<vmem>>, vector<128x256xbf16>
    %c0_4 = arith.constant 0 : index
    %c0_5 = arith.constant 0 : index
    %5 = vector.load %arg4[%c0_4, %c0_5] : memref<256x128xbf16, #tpu.memory_space<vmem>>, vector<256x128xbf16>
    %cst = arith.constant dense<0.000000e+00> : vector<128x128xf32>
    %6 = tpu.matmul %4, %5, %cst {dimension_numbers = #tpu.dot_dimension_numbers<[1], [0], [0], [1], [0, 0, 1, 1], [], []>} : vector<128x256xbf16>, vector<256x128xbf16>, vector<128x128xf32> -> vector<128x128xf32>
    %7 = arith.addf %3, %6 : vector<128x128xf32>
    %c0_6 = arith.constant 0 : index
    %c0_7 = arith.constant 0 : index
    %8 = vector.load %arg9[%c0_6, %c0_7] : memref<128x128xf32, #tpu.memory_space<vmem>>, vector<128x128xf32>
    tpu.vector_store %arg9[%c0_6, %c0_7], %7 {strides = array<i32>} : memref<128x128xf32, #tpu.memory_space<vmem>>, vector<128x128xf32>,
    %c0_i32_8 = arith.constant 0 : i32
    %9 = arith.cmpi eq, %arg2, %c0_i32_8 : i32
    %10 = arith.extui %9 : i1 to i32
    %c0_i32_9 = arith.constant 0 : i32
    %11 = arith.cmpi ne, %10, %c0_i32_9 : i32
    scf.if %11 {
      %c0_10 = arith.constant 0 : index
      %c0_11 = arith.constant 0 : index
      %12 = vector.load %arg9[%c0_10, %c0_11] : memref<128x128xf32, #tpu.memory_space<vmem>>, vector<128x128xf32>
      %cst_12 = arith.constant dense<0.000000e+00> : vector<128xf32>
      %13 = vector.multi_reduction <add>, %12, %cst_12 [0] : vector<128x128xf32> to vector<128xf32>
      %14 = vector.shape_cast %13 : vector<128xf32> to vector<1x128xf32>
      %15 = arith.mulf %12, %12 : vector<128x128xf32>
      %cst_13 = arith.constant dense<0.000000e+00> : vector<128xf32>
      %16 = vector.multi_reduction <add>, %15, %cst_13 [0] : vector<128x128xf32> to vector<128xf32>
      %17 = vector.shape_cast %16 : vector<128xf32> to vector<1x128xf32>
      %18 = tpu.concatenate %14, %17 in 0 : vector<1x128xf32>, vector<1x128xf32> -> vector<2x128xf32>
      %19 = vector.shape_cast %18 : vector<2x128xf32> to vector<1x2x128xf32>
      %c0_14 = arith.constant 0 : index
      %c0_15 = arith.constant 0 : index
      %c0_16 = arith.constant 0 : index
      %20 = vector.load %arg8[%c0_14, %c0_15, %c0_16] : memref<1x2x128xf32, #tpu.memory_space<vmem>>, vector<1x2x128xf32>
      tpu.vector_store %arg8[%c0_14, %c0_15, %c0_16], %19 {strides = array<i32>} : memref<1x2x128xf32, #tpu.memory_space<vmem>>, vector<1x2x128xf32>,
      %c0_17 = arith.constant 0 : index
      %c0_18 = arith.constant 0 : index
      %21 = vector.load %arg5[%c0_17, %c0_18] : memref<1x128xf32, #tpu.memory_space<vmem>>, vector<1x128xf32>
      %22 = vector.broadcast %21 : vector<1x128xf32> to vector<128x128xf32>
      %23 = arith.mulf %12, %22 : vector<128x128xf32>
      %c0_19 = arith.constant 0 : index
      %c0_20 = arith.constant 0 : index
      %24 = vector.load %arg6[%c0_19, %c0_20] : memref<1x128xf32, #tpu.memory_space<vmem>>, vector<1x128xf32>
      %25 = vector.broadcast %24 : vector<1x128xf32> to vector<128x128xf32>
      %26 = arith.addf %23, %25 : vector<128x128xf32>
      %c0_21 = arith.constant 0 : index
      %c0_22 = arith.constant 0 : index
      %27 = vector.load %arg7[%c0_21, %c0_22] : memref<128x128xf32, #tpu.memory_space<vmem>>, vector<128x128xf32>
      tpu.vector_store %arg7[%c0_21, %c0_22], %26 {strides = array<i32>} : memref<128x128xf32, #tpu.memory_space<vmem>>, vector<128x128xf32>,
    } else {
    }
    return
  }
  func.func @transform_0(%arg0: i32, %arg1: i32, %arg2: i32) -> (i32, i32) {
    %c0_i32 = arith.constant 0 : i32
    return %arg0, %arg2 : i32, i32
  }
  func.func @transform_1(%arg0: i32, %arg1: i32, %arg2: i32) -> (i32, i32) {
    %c0_i32 = arith.constant 0 : i32
    return %arg2, %arg1 : i32, i32
  }
  func.func @transform_2(%arg0: i32, %arg1: i32, %arg2: i32) -> (i32, i32) {
    %c0_i32 = arith.constant 0 : i32
    %c0_i32_0 = arith.constant 0 : i32
    return %c0_i32, %arg1 : i32, i32
  }
  func.func @transform_3(%arg0: i32, %arg1: i32, %arg2: i32) -> (i32, i32) {
    %c0_i32 = arith.constant 0 : i32
    %c0_i32_0 = arith.constant 0 : i32
    return %c0_i32, %arg1 : i32, i32
  }
  func.func @transform_4(%arg0: i32, %arg1: i32, %arg2: i32) -> (i32, i32) {
    %c0_i32 = arith.constant 0 : i32
    return %arg0, %arg1 : i32, i32
  }
  func.func @transform_5(%arg0: i32, %arg1: i32, %arg2: i32) -> (i32, i32, i32) {
    %c0_i32 = arith.constant 0 : i32
    %c0_i32_0 = arith.constant 0 : i32
    return %arg0, %c0_i32, %arg1 : i32, i32, i32
  }
}

</mosaic_0001>

<llo_original>
// kernel: tpu_custom_call.1
$region0: #{tpu_custom_call.1}
  #allocation0 [shape = 'u32[]', space=smem, size = 0x4, offset = 0x4, fixed_abs, tag = 'smem constant byte address 0x4 - core index']
  #allocation1 [shape = 'u32[144,128]{1,0:T(1,128)}', space=vmem, size = 0x12000, scoped, tag = 'internal scratch']
  #allocation2 [shape = 'f32[128,128]{1,0:T(8,128)}', space=vmem, size = 0x10000, scoped, tag = 'scratch operand']
  %s0 = inlined_call_operand.hbm [shape: bf16[128,256], index: 0, kind: input, shape index: {}]
  %s1 = inlined_call_operand.hbm [shape: bf16[256,128], index: 1, kind: input, shape index: {}]
  %s2 = inlined_call_operand.vmem [shape: f32[1,128], index: 2, kind: input, shape index: {}]
  %s3 = inlined_call_operand.vmem [shape: f32[1,128], index: 3, kind: input, shape index: {}]
  %s4 = inlined_call_operand.hbm [shape: f32[128,128], index: 4, kind: output, shape index: {0}]
  %s5 = inlined_call_operand.hbm [shape: f32[1,2,128], index: 5, kind: output, shape index: {1}]
  %6 = xla_tuple %s4, %s5
  %s7 = sld [smem:[#allocation0]]
  $region50: #{tpu_custom_call.1} parent=0
    _
  %s9 = ssub.s32 1, %s7
  %s10 = scalar_select 0, %s9, %s7
  $region1: #{tpu_custom_call.1} parent=0
    #allocation3 [shape = 'u8[65536]{0}', space=vmem, size = 0x10000, scoped, tag = 'input window, operand 0, single buffered']
    #allocation4 [shape = 's32[1]{0}', space=sflag, size = 0x4, scoped, tag = 'scoped memory for tpu_custom_call.1']
    #allocation5 [shape = 's32[1]{0}', space=sflag, size = 0x4, scoped, tag = 'scoped memory for tpu_custom_call.1']
    #allocation6 [shape = 'u8[65536]{0}', space=vmem, size = 0x10000, scoped, tag = 'input window, operand 1, single buffered']
    #allocation7 [shape = 's32[1]{0}', space=sflag, size = 0x4, scoped, tag = 'scoped memory for tpu_custom_call.1']
    #allocation8 [shape = 'u8[65536]{0}', space=vmem, size = 0x10000, scoped, tag = 'output window, operand 0, single buffered']
    #allocation9 [shape = 'u8[1024]{0}', space=vmem, size = 0x400, scoped, tag = 'output window, operand 1, single buffered']
    #allocation10 [shape = 's32[1]{0}', space=sflag, size = 0x4, scoped, tag = 'scoped memory for tpu_custom_call.1']
    %11 = vsyncpa [#allocation4], 0
    %12 = vsyncpa [#allocation7], 0
    %13 = vsyncpa [#allocation5], 0
    %14 = vsyncpa [#allocation10], 0
    // Predicated region
    $region2: #{tpu_custom_call.1} parent=1 // pred_check
      _
    $region3: #{tpu_custom_call.1} parent=1 // pred_check_branch
      %16 = sbr.rel (0) target = $region5
    $region4: #{tpu_custom_call.1} parent=1 // pred_region
      %s18 = ssub.s32 2048, 2048
      %19 = vsyncadd [#allocation4], %s18
      %s20 = sshll.u32 [#allocation3], 4
      %s21 = int_to_ptr.vmem [resolvable:$true] %s20
      %26 = dma.hbm_to_vmem [thread:$0]  %s0, 2048, %s21, [#allocation4], 128, 128, 8
    $region5: #{tpu_custom_call.1} parent=1 // pred_fallthru
      _
    // Predicated region
    $region6: #{tpu_custom_call.1} parent=1 // pred_check
      _
    $region7: #{tpu_custom_call.1} parent=1 // pred_check_branch
      %28 = sbr.rel (0) target = $region9
    $region8: #{tpu_custom_call.1} parent=1 // pred_region
      %s30 = ssub.s32 2048, 2048
      %31 = vsyncadd [#allocation7], %s30
      %s32 = sshll.u32 [#allocation6], 4
      %s33 = int_to_ptr.vmem [resolvable:$true] %s32
      %38 = dma.hbm_to_vmem [thread:$0]  %s1, 2048, %s33, [#allocation7], 64, 64, 4
    $region9: #{tpu_custom_call.1} parent=1 // pred_fallthru
      _
    // Predicated region
    $region10: #{tpu_custom_call.1} parent=1 // pred_check
      _
    $region11: #{tpu_custom_call.1} parent=1 // pred_check_branch
      %40 = sbr.rel (0) target = $region13
    $region12: #{tpu_custom_call.1} parent=1 // pred_region
      _
    $region13: #{tpu_custom_call.1} parent=1 // pred_fallthru
      _
    // Predicated region
    $region14: #{tpu_custom_call.1} parent=1 // pred_check
      _
    $region15: #{tpu_custom_call.1} parent=1 // pred_check_branch
      %42 = sbr.rel (0) target = $region17
    $region16: #{tpu_custom_call.1} parent=1 // pred_region
      _
    $region17: #{tpu_custom_call.1} parent=1 // pred_fallthru
      _
    // Predicated region
    $region18: #{tpu_custom_call.1} parent=1 // pred_check
      _
    $region19: #{tpu_custom_call.1} parent=1 // pred_check_branch
      %44 = sbr.rel (0) target = $region21
    $region20: #{tpu_custom_call.1} parent=1 // pred_region
      %45 = dma.done [#allocation4], 2048
    $region21: #{tpu_custom_call.1} parent=1 // pred_fallthru
      _
    // Predicated region
    $region22: #{tpu_custom_call.1} parent=1 // pred_check
      _
    $region23: #{tpu_custom_call.1} parent=1 // pred_check_branch
      %47 = sbr.rel (0) target = $region25
    $region24: #{tpu_custom_call.1} parent=1 // pred_region
      %48 = dma.done [#allocation7], 2048
    $region25: #{tpu_custom_call.1} parent=1 // pred_fallthru
      _
    %p50 = scmp.eq.s32.totalorder 0, 0
    // Predicated region
    $region26: #{tpu_custom_call.1} parent=1 // pred_check
      %p51 = pneg %p50
    $region27: #{tpu_custom_call.1} parent=1 // pred_check_branch
      %53 = sbr.rel (%p51) target = $region29
    $region28: #{tpu_custom_call.1} parent=1 // pred_region
      %54 = vst [vmem:[#allocation2] sm:$0xff] 0.0
      %55 = vst [vmem:[#allocation2 + $0x8] sm:$0xff] 0.0
      %56 = vst [vmem:[#allocation2 + $0x10] sm:$0xff] 0.0
      %57 = vst [vmem:[#allocation2 + $0x18] sm:$0xff] 0.0
      %58 = vst [vmem:[#allocation2 + $0x20] sm:$0xff] 0.0
      %59 = vst [vmem:[#allocation2 + $0x28] sm:$0xff] 0.0
      %60 = vst [vmem:[#allocation2 + $0x30] sm:$0xff] 0.0
      %61 = vst [vmem:[#allocation2 + $0x38] sm:$0xff] 0.0
      %62 = vst [vmem:[#allocation2 + $0x40] sm:$0xff] 0.0
      %63 = vst [vmem:[#allocation2 + $0x48] sm:$0xff] 0.0
      %64 = vst [vmem:[#allocation2 + $0x50] sm:$0xff] 0.0
      %65 = vst [vmem:[#allocation2 + $0x58] sm:$0xff] 0.0
      %66 = vst [vmem:[#allocation2 + $0x60] sm:$0xff] 0.0
      %67 = vst [vmem:[#allocation2 + $0x68] sm:$0xff] 0.0
      %68 = vst [vmem:[#allocation2 + $0x70] sm:$0xff] 0.0
      %69 = vst [vmem:[#allocation2 + $0x78] sm:$0xff] 0.0
    $region29: #{tpu_custom_call.1} parent=1 // pred_fallthru
      _
    %v70 = vld [vmem:[#allocation2] sm:$0xff]
    %v71 = vld [vmem:[#allocation2 + $0x8] sm:$0xff]
    %v72 = vld [vmem:[#allocation2 + $0x10] sm:$0xff]
    %v73 = vld [vmem:[#allocation2 + $0x18] sm:$0xff]
    %v74 = vld [vmem:[#allocation2 + $0x20] sm:$0xff]
    %v75 = vld [vmem:[#allocation2 + $0x28] sm:$0xff]
    %v76 = vld [vmem:[#allocation2 + $0x30] sm:$0xff]
    %v77 = vld [vmem:[#allocation2 + $0x38] sm:$0xff]
    %v78 = vld [vmem:[#allocation2 + $0x40] sm:$0xff]
    %v79 = vld [vmem:[#allocation2 + $0x48] sm:$0xff]
    %v80 = vld [vmem:[#allocation2 + $0x50] sm:$0xff]
    %v81 = vld [vmem:[#allocation2 + $0x58] sm:$0xff]
    %v82 = vld [vmem:[#allocation2 + $0x60] sm:$0xff]
    %v83 = vld [vmem:[#allocation2 + $0x68] sm:$0xff]
    %v84 = vld [vmem:[#allocation2 + $0x70] sm:$0xff]
    %v85 = vld [vmem:[#allocation2 + $0x78] sm:$0xff]
    %v86 = vld [vmem:[#allocation3] sm:$0xff]
    %v87 = vld [vmem:[#allocation3 + $0x8] sm:$0xff]
    %v88 = vld [vmem:[#allocation3 + $0x10] sm:$0xff]
    %v89 = vld [vmem:[#allocation3 + $0x18] sm:$0xff]
    %v90 = vld [vmem:[#allocation3 + $0x20] sm:$0xff]
    %v91 = vld [vmem:[#allocation3 + $0x28] sm:$0xff]
    %v92 = vld [vmem:[#allocation3 + $0x30] sm:$0xff]
    %v93 = vld [vmem:[#allocation3 + $0x38] sm:$0xff]
    %v94 = vld [vmem:[#allocation3 + $0x40] sm:$0xff]
    %v95 = vld [vmem:[#allocation3 + $0x48] sm:$0xff]
    %v96 = vld [vmem:[#allocation3 + $0x50] sm:$0xff]
    %v97 = vld [vmem:[#allocation3 + $0x58] sm:$0xff]
    %v98 = vld [vmem:[#allocation3 + $0x60] sm:$0xff]
    %v99 = vld [vmem:[#allocation3 + $0x68] sm:$0xff]
    %v100 = vld [vmem:[#allocation3 + $0x70] sm:$0xff]
    %v101 = vld [vmem:[#allocation3 + $0x78] sm:$0xff]
    %v102 = vld [vmem:[#allocation6] sm:$0xf]
    %v103 = vld [vmem:[#allocation6 + $0x4] sm:$0xf]
    %v104 = vld [vmem:[#allocation6 + $0x8] sm:$0xf]
    %v105 = vld [vmem:[#allocation6 + $0xc] sm:$0xf]
    %v106 = vld [vmem:[#allocation6 + $0x10] sm:$0xf]
    %v107 = vld [vmem:[#allocation6 + $0x14] sm:$0xf]
    %v108 = vld [vmem:[#allocation6 + $0x18] sm:$0xf]
    %v109 = vld [vmem:[#allocation6 + $0x1c] sm:$0xf]
    %v110 = vld [vmem:[#allocation6 + $0x20] sm:$0xf]
    %v111 = vld [vmem:[#allocation6 + $0x24] sm:$0xf]
    %v112 = vld [vmem:[#allocation6 + $0x28] sm:$0xf]
    %v113 = vld [vmem:[#allocation6 + $0x2c] sm:$0xf]
    %v114 = vld [vmem:[#allocation6 + $0x30] sm:$0xf]
    %v115 = vld [vmem:[#allocation6 + $0x34] sm:$0xf]
    %v116 = vld [vmem:[#allocation6 + $0x38] sm:$0xf]
    %v117 = vld [vmem:[#allocation6 + $0x3c] sm:$0xf]
    %v118 = vld [vmem:[#allocation6 + $0x40] sm:$0xf]
    %v119 = vld [vmem:[#allocation6 + $0x44] sm:$0xf]
    %v120 = vld [vmem:[#allocation6 + $0x48] sm:$0xf]
    %v121 = vld [vmem:[#allocation6 + $0x4c] sm:$0xf]
    %v122 = vld [vmem:[#allocation6 + $0x50] sm:$0xf]
    %v123 = vld [vmem:[#allocation6 + $0x54] sm:$0xf]
    %v124 = vld [vmem:[#allocation6 + $0x58] sm:$0xf]
    %v125 = vld [vmem:[#allocation6 + $0x5c] sm:$0xf]
    %v126 = vld [vmem:[#allocation6 + $0x60] sm:$0xf]
    %v127 = vld [vmem:[#allocation6 + $0x64] sm:$0xf]
    %v128 = vld [vmem:[#allocation6 + $0x68] sm:$0xf]
    %v129 = vld [vmem:[#allocation6 + $0x6c] sm:$0xf]
    %v130 = vld [vmem:[#allocation6 + $0x70] sm:$0xf]
    %v131 = vld [vmem:[#allocation6 + $0x74] sm:$0xf]
    %v132 = vld [vmem:[#allocation6 + $0x78] sm:$0xf]
    %v133 = vld [vmem:[#allocation6 + $0x7c] sm:$0xf]
    %v150 = vunpack.c.l.b16 %v86
    %v151 = vunpack.c.h.b16 %v86
    %v152 = vunpack.c.l.b16 %v87
    %v153 = vunpack.c.h.b16 %v87
    %v154 = vunpack.c.l.b16 %v88
    %v155 = vunpack.c.h.b16 %v88
    %v156 = vunpack.c.l.b16 %v89
    %v157 = vunpack.c.h.b16 %v89
    %v158 = vunpack.c.l.b16 %v90
    %v159 = vunpack.c.h.b16 %v90
    %v160 = vunpack.c.l.b16 %v91
    %v161 = vunpack.c.h.b16 %v91
    %v162 = vunpack.c.l.b16 %v92
    %v163 = vunpack.c.h.b16 %v92
    %v164 = vunpack.c.l.b16 %v93
    %v165 = vunpack.c.h.b16 %v93
    %v166 = vunpack.c.l.b16 %v94
    %v167 = vunpack.c.h.b16 %v94
    %v168 = vunpack.c.l.b16 %v95
    %v169 = vunpack.c.h.b16 %v95
    %v170 = vunpack.c.l.b16 %v96
    %v171 = vunpack.c.h.b16 %v96
    %v172 = vunpack.c.l.b16 %v97
    %v173 = vunpack.c.h.b16 %v97
    %v174 = vunpack.c.l.b16 %v98
    %v175 = vunpack.c.h.b16 %v98
    %v176 = vunpack.c.l.b16 %v99
    %v177 = vunpack.c.h.b16 %v99
    %v178 = vunpack.c.l.b16 %v100
    %v179 = vunpack.c.h.b16 %v100
    %v180 = vunpack.c.l.b16 %v101
    %v181 = vunpack.c.h.b16 %v101
    %v182 = vpack.c.b16 %v152, %v150
    %v183 = vpack.c.b16 %v153, %v151
    %v184 = vpack.c.b16 %v156, %v154
    %v185 = vpack.c.b16 %v157, %v155
    %v186 = vpack.c.b16 %v160, %v158
    %v187 = vpack.c.b16 %v161, %v159
    %v188 = vpack.c.b16 %v164, %v162
    %v189 = vpack.c.b16 %v165, %v163
    %v190 = vpack.c.b16 %v168, %v166
    %v191 = vpack.c.b16 %v169, %v167
    %v192 = vpack.c.b16 %v172, %v170
    %v193 = vpack.c.b16 %v173, %v171
    %v194 = vpack.c.b16 %v176, %v174
    %v195 = vpack.c.b16 %v177, %v175
    %v196 = vpack.c.b16 %v180, %v178
    %v197 = vpack.c.b16 %v181, %v179
    %v246 = vunpack.c.l.b16 %v102
    %v247 = vunpack.c.l.b16 %v103
    %v248 = vunpack.c.l.b16 %v104
    %v249 = vunpack.c.l.b16 %v105
    %v250 = vunpack.c.l.b16 %v106
    %v251 = vunpack.c.l.b16 %v107
    %v252 = vunpack.c.l.b16 %v108
    %v253 = vunpack.c.l.b16 %v109
    %v254 = vunpack.c.l.b16 %v110
    %v255 = vunpack.c.l.b16 %v111
    %v256 = vunpack.c.l.b16 %v112
    %v257 = vunpack.c.l.b16 %v113
    %v258 = vunpack.c.l.b16 %v114
    %v259 = vunpack.c.l.b16 %v115
    %v260 = vunpack.c.l.b16 %v116
    %v261 = vunpack.c.l.b16 %v117
    %v262 = vunpack.c.l.b16 %v118
    %v263 = vunpack.c.l.b16 %v119
    %v264 = vunpack.c.l.b16 %v120
    %v265 = vunpack.c.l.b16 %v121
    %v266 = vunpack.c.l.b16 %v122
    %v267 = vunpack.c.l.b16 %v123
    %v268 = vunpack.c.l.b16 %v124
    %v269 = vunpack.c.l.b16 %v125
    %v270 = vunpack.c.l.b16 %v126
    %v271 = vunpack.c.l.b16 %v127
    %v272 = vunpack.c.l.b16 %v128
    %v273 = vunpack.c.l.b16 %v129
    %v274 = vunpack.c.l.b16 %v130
    %v275 = vunpack.c.l.b16 %v131
    %v276 = vunpack.c.l.b16 %v132
    %v277 = vunpack.c.l.b16 %v133
    %v278 = vpack.c.b16 %v247, %v246
    %v279 = vpack.c.b16 %v249, %v248
    %v280 = vpack.c.b16 %v251, %v250
    %v281 = vpack.c.b16 %v253, %v252
    %v282 = vpack.c.b16 %v255, %v254
    %v283 = vpack.c.b16 %v257, %v256
    %v284 = vpack.c.b16 %v259, %v258
    %v285 = vpack.c.b16 %v261, %v260
    %v286 = vpack.c.b16 %v263, %v262
    %v287 = vpack.c.b16 %v265, %v264
    %v288 = vpack.c.b16 %v267, %v266
    %v289 = vpack.c.b16 %v269, %v268
    %v290 = vpack.c.b16 %v271, %v270
    %v291 = vpack.c.b16 %v273, %v272
    %v292 = vpack.c.b16 %v275, %v274
    %v293 = vpack.c.b16 %v277, %v276
    %310 = vmatprep.subr.bf16.mxu0 0
    %311 = vmatpush1.bf16.msra.mxu0 %v278
    %312 = vmatprep.subr.bf16.mxu0 0
    %313 = vmatpush1.bf16.msra.mxu0 %v279
    %314 = vmatprep.subr.bf16.mxu0 0
    %315 = vmatpush1.bf16.msra.mxu0 %v280
    %316 = vmatprep.subr.bf16.mxu0 0
    %317 = vmatpush1.bf16.msra.mxu0 %v281
    %318 = vmatprep.subr.bf16.mxu0 0
    %319 = vmatpush1.bf16.msra.mxu0 %v282
    %320 = vmatprep.subr.bf16.mxu0 0
    %321 = vmatpush1.bf16.msra.mxu0 %v283
    %322 = vmatprep.subr.bf16.mxu0 0
    %323 = vmatpush1.bf16.msra.mxu0 %v284
    %324 = vmatprep.subr.bf16.mxu0 0
    %325 = vmatpush1.bf16.msra.mxu0 %v285
    %326 = vmatprep.subr.bf16.mxu0 0
    %327 = vmatpush1.bf16.msra.mxu0 %v286
    %328 = vmatprep.subr.bf16.mxu0 0
    %329 = vmatpush1.bf16.msra.mxu0 %v287
    %330 = vmatprep.subr.bf16.mxu0 0
    %331 = vmatpush1.bf16.msra.mxu0 %v288
    %332 = vmatprep.subr.bf16.mxu0 0
    %333 = vmatpush1.bf16.msra.mxu0 %v289
    %334 = vmatprep.subr.bf16.mxu0 0
    %335 = vmatpush1.bf16.msra.mxu0 %v290
    %336 = vmatprep.subr.bf16.mxu0 0
    %337 = vmatpush1.bf16.msra.mxu0 %v291
    %338 = vmatprep.subr.bf16.mxu0 0
    %339 = vmatpush1.bf16.msra.mxu0 %v292
    %340 = vmatprep.subr.bf16.mxu0 0
    %341 = vmatpush1.bf16.msra.mxu0 %v293
    %342 = vmatprep.mubr.bf16.mxu0 %v183
    %343 = vmatmul.mubr.bf16.gmra.mrb[0].mxu0 %v182
    %v344 = vpop.f32.mrb[0].mxu0
    %v345 = vadd.f32 0.0, %v344
    %v346 = vpop.f32.mrb[0].mxu0
    %v347 = vpop.f32.mrb[0].mxu0
    %v348 = vadd.f32 0.0, %v347
    %v349 = vpop.f32.mrb[0].mxu0
    %350 = vmatprep.mubr.bf16.mxu0 %v185
    %351 = vmatmul.mubr.bf16.gmra.mrb[0].mxu0 %v184
    %v352 = vpop.f32.mrb[0].mxu0
    %v353 = vadd.f32 0.0, %v352
    %v354 = vpop.f32.mrb[0].mxu0
    %v355 = vpop.f32.mrb[0].mxu0
    %v356 = vadd.f32 0.0, %v355
    %v357 = vpop.f32.mrb[0].mxu0
    %358 = vmatprep.mubr.bf16.mxu0 %v187
    %359 = vmatmul.mubr.bf16.gmra.mrb[0].mxu0 %v186
    %v360 = vpop.f32.mrb[0].mxu0
    %v361 = vadd.f32 0.0, %v360
    %v362 = vpop.f32.mrb[0].mxu0
    %v363 = vpop.f32.mrb[0].mxu0
    %v364 = vadd.f32 0.0, %v363
    %v365 = vpop.f32.mrb[0].mxu0
    %366 = vmatprep.mubr.bf16.mxu0 %v189
    %367 = vmatmul.mubr.bf16.gmra.mrb[0].mxu0 %v188
    %v368 = vpop.f32.mrb[0].mxu0
    %v369 = vadd.f32 0.0, %v368
    %v370 = vpop.f32.mrb[0].mxu0
    %v371 = vpop.f32.mrb[0].mxu0
    %v372 = vadd.f32 0.0, %v371
    %v373 = vpop.f32.mrb[0].mxu0
    %374 = vmatprep.mubr.bf16.mxu0 %v191
    %375 = vmatmul.mubr.bf16.gmra.mrb[0].mxu0 %v190
    %v376 = vpop.f32.mrb[0].mxu0
    %v377 = vadd.f32 0.0, %v376
    %v378 = vpop.f32.mrb[0].mxu0
    %v379 = vpop.f32.mrb[0].mxu0
    %v380 = vadd.f32 0.0, %v379
    %v381 = vpop.f32.mrb[0].mxu0
    %382 = vmatprep.mubr.bf16.mxu0 %v193
    %383 = vmatmul.mubr.bf16.gmra.mrb[0].mxu0 %v192
    %v384 = vpop.f32.mrb[0].mxu0
    %v385 = vadd.f32 0.0, %v384
    %v386 = vpop.f32.mrb[0].mxu0
    %v387 = vpop.f32.mrb[0].mxu0
    %v388 = vadd.f32 0.0, %v387
    %v389 = vpop.f32.mrb[0].mxu0
    %390 = vmatprep.mubr.bf16.mxu0 %v195
    %391 = vmatmul.mubr.bf16.gmra.mrb[0].mxu0 %v194
    %v392 = vpop.f32.mrb[0].mxu0
    %v393 = vadd.f32 0.0, %v392
    %v394 = vpop.f32.mrb[0].mxu0
    %v395 = vpop.f32.mrb[0].mxu0
    %v396 = vadd.f32 0.0, %v395
    %v397 = vpop.f32.mrb[0].mxu0
    %398 = vmatprep.mubr.bf16.mxu0 %v197
    %399 = vmatmul.mubr.bf16.gmra.mrb[0].mxu0 %v196
    %v400 = vpop.f32.mrb[0].mxu0
    %v401 = vadd.f32 0.0, %v400
    %v402 = vpop.f32.mrb[0].mxu0
    %v403 = vpop.f32.mrb[0].mxu0
    %v404 = vadd.f32 0.0, %v403
    %v405 = vpop.f32.mrb[0].mxu0
    %406 = vdwg.mxu0
    %v407 = vadd.f32 %v70, %v345
    %v408 = vadd.f32 %v71, %v348
    %v409 = vadd.f32 %v72, %v353
    %v410 = vadd.f32 %v73, %v356
    %v411 = vadd.f32 %v74, %v361
    %v412 = vadd.f32 %v75, %v364
    %v413 = vadd.f32 %v76, %v369
    %v414 = vadd.f32 %v77, %v372
    %v415 = vadd.f32 %v78, %v377
    %v416 = vadd.f32 %v79, %v380
    %v417 = vadd.f32 %v80, %v385
    %v418 = vadd.f32 %v81, %v388
    %v419 = vadd.f32 %v82, %v393
    %v420 = vadd.f32 %v83, %v396
    %v421 = vadd.f32 %v84, %v401
    %v422 = vadd.f32 %v85, %v404
    %423 = vst [vmem:[#allocation2] sm:$0xff] %v407
    %424 = vst [vmem:[#allocation2 + $0x8] sm:$0xff] %v408
    %425 = vst [vmem:[#allocation2 + $0x10] sm:$0xff] %v409
    %426 = vst [vmem:[#allocation2 + $0x18] sm:$0xff] %v410
    %427 = vst [vmem:[#allocation2 + $0x20] sm:$0xff] %v411
    %428 = vst [vmem:[#allocation2 + $0x28] sm:$0xff] %v412
    %429 = vst [vmem:[#allocation2 + $0x30] sm:$0xff] %v413
    %430 = vst [vmem:[#allocation2 + $0x38] sm:$0xff] %v414
    %431 = vst [vmem:[#allocation2 + $0x40] sm:$0xff] %v415
    %432 = vst [vmem:[#allocation2 + $0x48] sm:$0xff] %v416
    %433 = vst [vmem:[#allocation2 + $0x50] sm:$0xff] %v417
    %434 = vst [vmem:[#allocation2 + $0x58] sm:$0xff] %v418
    %435 = vst [vmem:[#allocation2 + $0x60] sm:$0xff] %v419
    %436 = vst [vmem:[#allocation2 + $0x68] sm:$0xff] %v420
    %437 = vst [vmem:[#allocation2 + $0x70] sm:$0xff] %v421
    %438 = vst [vmem:[#allocation2 + $0x78] sm:$0xff] %v422
    // Predicated region
    $region30: #{tpu_custom_call.1} parent=1 // pred_check
      %p439 = pneg %p50
    $region31: #{tpu_custom_call.1} parent=1 // pred_check_branch
      %441 = sbr.rel (%p439) target = $region33
    $region32: #{tpu_custom_call.1} parent=1 // pred_region
      %v442 = vld [vmem:[#allocation2] sm:$0xff]
      %v443 = vld [vmem:[#allocation2 + $0x8] sm:$0xff]
      %v444 = vld [vmem:[#allocation2 + $0x10] sm:$0xff]
      %v445 = vld [vmem:[#allocation2 + $0x18] sm:$0xff]
      %v446 = vld [vmem:[#allocation2 + $0x20] sm:$0xff]
      %v447 = vld [vmem:[#allocation2 + $0x28] sm:$0xff]
      %v448 = vld [vmem:[#allocation2 + $0x30] sm:$0xff]
      %v449 = vld [vmem:[#allocation2 + $0x38] sm:$0xff]
      %v450 = vld [vmem:[#allocation2 + $0x40] sm:$0xff]
      %v451 = vld [vmem:[#allocation2 + $0x48] sm:$0xff]
      %v452 = vld [vmem:[#allocation2 + $0x50] sm:$0xff]
      %v453 = vld [vmem:[#allocation2 + $0x58] sm:$0xff]
      %v454 = vld [vmem:[#allocation2 + $0x60] sm:$0xff]
      %v455 = vld [vmem:[#allocation2 + $0x68] sm:$0xff]
      %v456 = vld [vmem:[#allocation2 + $0x70] sm:$0xff]
      %v457 = vld [vmem:[#allocation2 + $0x78] sm:$0xff]
      %v458 = vadd.f32 %v442, %v443
      %v459 = vadd.f32 %v458, %v444
      %v460 = vadd.f32 %v459, %v445
      %v461 = vadd.f32 %v460, %v446
      %v462 = vadd.f32 %v461, %v447
      %v463 = vadd.f32 %v462, %v448
      %v464 = vadd.f32 %v463, %v449
      %v465 = vadd.f32 %v464, %v450
      %v466 = vadd.f32 %v465, %v451
      %v467 = vadd.f32 %v466, %v452
      %v468 = vadd.f32 %v467, %v453
      %v469 = vadd.f32 %v468, %v454
      %v470 = vadd.f32 %v469, %v455
      %v471 = vadd.f32 %v470, %v456
      %v472 = vadd.f32 %v471, %v457
      %v473 = vrot.slane %v472, 4
      %v474 = vadd.f32 %v472, %v473
      %v475 = vrot.slane %v474, 2
      %v476 = vadd.f32 %v474, %v475
      %v477 = vrot.slane %v476, 1
      %v478 = vadd.f32 %v476, %v477
      %v479 = vmul.f32 %v442, %v442
      %v480 = vmul.f32 %v443, %v443
      %v481 = vmul.f32 %v444, %v444
      %v482 = vmul.f32 %v445, %v445
      %v483 = vmul.f32 %v446, %v446
      %v484 = vmul.f32 %v447, %v447
      %v485 = vmul.f32 %v448, %v448
      %v486 = vmul.f32 %v449, %v449
      %v487 = vmul.f32 %v450, %v450
      %v488 = vmul.f32 %v451, %v451
      %v489 = vmul.f32 %v452, %v452
      %v490 = vmul.f32 %v453, %v453
      %v491 = vmul.f32 %v454, %v454
      %v492 = vmul.f32 %v455, %v455
      %v493 = vmul.f32 %v456, %v456
      %v494 = vmul.f32 %v457, %v457
      %v495 = vadd.f32 %v479, %v480
      %v496 = vadd.f32 %v495, %v481
      %v497 = vadd.f32 %v496, %v482
      %v498 = vadd.f32 %v497, %v483
      %v499 = vadd.f32 %v498, %v484
      %v500 = vadd.f32 %v499, %v485
      %v501 = vadd.f32 %v500, %v486
      %v502 = vadd.f32 %v501, %v487
      %v503 = vadd.f32 %v502, %v488
      %v504 = vadd.f32 %v503, %v489
      %v505 = vadd.f32 %v504, %v490
      %v506 = vadd.f32 %v505, %v491
      %v507 = vadd.f32 %v506, %v492
      %v508 = vadd.f32 %v507, %v493
      %v509 = vadd.f32 %v508, %v494
      %v510 = vrot.slane %v509, 4
      %v511 = vadd.f32 %v509, %v510
      %v512 = vrot.slane %v511, 2
      %v513 = vadd.f32 %v511, %v512
      %v514 = vrot.slane %v513, 1
      %v515 = vadd.f32 %v513, %v514
      %vm516 = vcmask 1040384
      %v517 = vsel %vm516, %v478, %v515
      %518 = vst [vmem:[#allocation9] sm:$0x3] %v517
      %v519 = vld [vmem:[%s2] sm:$0x1]
      %v521 = vlaneseq
      %v522 = vshrl.u32 %v521, 7
      %v523 = vsub.s32 0, %v522
      %v524 = vrot.slane %v519, %v523
      %v526 = vmul.f32 %v442, %v524
      %v527 = vmul.f32 %v443, %v524
      %v528 = vmul.f32 %v444, %v524
      %v529 = vmul.f32 %v445, %v524
      %v530 = vmul.f32 %v446, %v524
      %v531 = vmul.f32 %v447, %v524
      %v532 = vmul.f32 %v448, %v524
      %v533 = vmul.f32 %v449, %v524
      %v534 = vmul.f32 %v450, %v524
      %v535 = vmul.f32 %v451, %v524
      %v536 = vmul.f32 %v452, %v524
      %v537 = vmul.f32 %v453, %v524
      %v538 = vmul.f32 %v454, %v524
      %v539 = vmul.f32 %v455, %v524
      %v540 = vmul.f32 %v456, %v524
      %v541 = vmul.f32 %v457, %v524
      %v542 = vld [vmem:[%s3] sm:$0x1]
      %v544 = vlaneseq
      %v545 = vshrl.u32 %v544, 7
      %v546 = vsub.s32 0, %v545
      %v547 = vrot.slane %v542, %v546
      %v549 = vadd.f32 %v526, %v547
      %v550 = vadd.f32 %v527, %v547
      %v551 = vadd.f32 %v528, %v547
      %v552 = vadd.f32 %v529, %v547
      %v553 = vadd.f32 %v530, %v547
      %v554 = vadd.f32 %v531, %v547
      %v555 = vadd.f32 %v532, %v547
      %v556 = vadd.f32 %v533, %v547
      %v557 = vadd.f32 %v534, %v547
      %v558 = vadd.f32 %v535, %v547
      %v559 = vadd.f32 %v536, %v547
      %v560 = vadd.f32 %v537, %v547
      %v561 = vadd.f32 %v538, %v547
      %v562 = vadd.f32 %v539, %v547
      %v563 = vadd.f32 %v540, %v547
      %v564 = vadd.f32 %v541, %v547
      %565 = vst [vmem:[#allocation8] sm:$0xff] %v549
      %566 = vst [vmem:[#allocation8 + $0x8] sm:$0xff] %v550
      %567 = vst [vmem:[#allocation8 + $0x10] sm:$0xff] %v551
      %568 = vst [vmem:[#allocation8 + $0x18] sm:$0xff] %v552
      %569 = vst [vmem:[#allocation8 + $0x20] sm:$0xff] %v553
      %570 = vst [vmem:[#allocation8 + $0x28] sm:$0xff] %v554
      %571 = vst [vmem:[#allocation8 + $0x30] sm:$0xff] %v555
      %572 = vst [vmem:[#allocation8 + $0x38] sm:$0xff] %v556
      %573 = vst [vmem:[#allocation8 + $0x40] sm:$0xff] %v557
      %574 = vst [vmem:[#allocation8 + $0x48] sm:$0xff] %v558
      %575 = vst [vmem:[#allocation8 + $0x50] sm:$0xff] %v559
      %576 = vst [vmem:[#allocation8 + $0x58] sm:$0xff] %v560
      %577 = vst [vmem:[#allocation8 + $0x60] sm:$0xff] %v561
      %578 = vst [vmem:[#allocation8 + $0x68] sm:$0xff] %v562
      %579 = vst [vmem:[#allocation8 + $0x70] sm:$0xff] %v563
      %580 = vst [vmem:[#allocation8 + $0x78] sm:$0xff] %v564
    $region33: #{tpu_custom_call.1} parent=1 // pred_fallthru
      _
    // Predicated region
    $region34: #{tpu_custom_call.1} parent=1 // pred_check
      _
    $region35: #{tpu_custom_call.1} parent=1 // pred_check_branch
      %582 = sbr.rel (0) target = $region37
    $region36: #{tpu_custom_call.1} parent=1 // pred_region
      %s584 = ssub.s32 2048, 2048
      %585 = vsyncadd [#allocation5], %s584
      %s586 = sshll.u32 [#allocation8], 4
      %s587 = int_to_ptr.vmem [resolvable:$true] %s586
      %592 = dma.vmem_to_hbm [thread:$0]  %s587, 2048, %s4, [#allocation5], 128, 128, 8
    $region37: #{tpu_custom_call.1} parent=1 // pred_fallthru
      _
    // Predicated region
    $region38: #{tpu_custom_call.1} parent=1 // pred_check
      _
    $region39: #{tpu_custom_call.1} parent=1 // pred_check_branch
      %594 = sbr.rel (0) target = $region41
    $region40: #{tpu_custom_call.1} parent=1 // pred_region
      %s596 = ssub.s32 32, 32
      %597 = vsyncadd [#allocation10], %s596
      %s599 = sshll.u32 [#allocation9], 4
      %s600 = int_to_ptr.vmem [resolvable:$true] %s599
      %602 = dma.vmem_to_hbm [thread:$0]  %s600, 32, %s5, [#allocation10]
    $region41: #{tpu_custom_call.1} parent=1 // pred_fallthru
      _
    // Predicated region
    $region42: #{tpu_custom_call.1} parent=1 // pred_check
      _
    $region43: #{tpu_custom_call.1} parent=1 // pred_check_branch
      %604 = sbr.rel (0) target = $region45
    $region44: #{tpu_custom_call.1} parent=1 // pred_region
      %605 = dma.done [#allocation5], 2048
    $region45: #{tpu_custom_call.1} parent=1 // pred_fallthru
      _
    // Predicated region
    $region46: #{tpu_custom_call.1} parent=1 // pred_check
      _
    $region47: #{tpu_custom_call.1} parent=1 // pred_check_branch
      %607 = sbr.rel (0) target = $region49
    $region48: #{tpu_custom_call.1} parent=1 // pred_region
      %608 = dma.done [#allocation10], 32
    $region49: #{tpu_custom_call.1} parent=1 // pred_fallthru
      _
    %609 = vsyncpa [#allocation4], 1
    %610 = vsyncpa [#allocation7], 1
    %611 = vsyncpa [#allocation5], 1
    %612 = vsyncpa [#allocation10], 1

</llo_original>
